<compile_context>
chip_gen: v5e
topology: v5e:2x2
jax: 0.10.0
libtpu: 0.0.40
codegen_flags: <defaults>
</compile_context>

<pallas_src>
import functools
import math

import jax
import jax.numpy as jnp
from jax.experimental import pallas as pl
from jax.experimental.pallas import tpu as pltpu


def _embedding_gather_kernel(ids_ref, tab_ref, o_ref, buf_ref, sem,
                             *, scale, tm):
    # ids_ref: SMEM (M_pad,) int32 token ids (scalar prefetch)
    # tab_ref: HBM  (V, D)   embedding table (memory_space=pl.ANY, no auto-DMA)
    # o_ref:   VMEM (tm, D)  output tile for this row tile
    # buf_ref: VMEM (tm, D)  gather landing buffer
    # sem:     single DMA semaphore shared by all row copies of this tile
    base = pl.program_id(0) * tm

    # Issue all per-token row-gather DMAs for this tile (fully overlapped).
    @pl.loop(0, tm)
    def _issue(t):
        tok = ids_ref[base + t]
        pltpu.make_async_copy(tab_ref.at[tok], buf_ref.at[t], sem).start()

    # Wait once per issued copy. All copies have identical shape, so a
    # matching-shape descriptor with static indices is sufficient for the wait
    # (same trick as the paged-attention kernels).
    @pl.loop(0, tm)
    def _wait(t):
        pltpu.make_async_copy(tab_ref.at[0], buf_ref.at[0], sem).wait()

    # sqrt(d_model) scale hoisted out of any per-token / per-vocab loop:
    # one VPU multiply over the whole (tm, D) tile.
    o_ref[...] = (buf_ref[...] * scale).astype(o_ref.dtype)


def embedding_forward(ids, table, *, tm=128):
    """ids: int array (...,); table: (vocab, d_model).

    Returns table[ids] * sqrt(d_model), shape ids.shape + (d_model,).
    """
    orig_shape = ids.shape
    V, D = table.shape
    scale = math.sqrt(D)

    ids_flat = ids.reshape(-1).astype(jnp.int32)
    # Clamp to valid rows: PyTorch's nn.Embedding errors on out-of-range ids;
    # on TPU an OOB DMA would fault, so clamp instead of faulting.
    ids_flat = jnp.clip(ids_flat, 0, V - 1)
    M = ids_flat.shape[0]

    # Shrink the row tile for small inputs (keep it a multiple of 8 sublanes);
    # for realistic M the default tm=128 gives many "parallel" grid tiles.
    tm = max(8, min(tm, pl.cdiv(M, 8) * 8))
    M_pad = pl.cdiv(M, tm) * tm
    if M_pad != M:
        ids_flat = jnp.pad(ids_flat, (0, M_pad - M))   # pad ids -> row 0, sliced off below
    n_tiles = M_pad // tm

    kernel = functools.partial(_embedding_gather_kernel, scale=scale, tm=tm)

    # VMEM footprint: gather buffer (tm*D) + double-buffered output (2*tm*D)
    # + small scratch; add headroom and cap well below v7x's 64 MiB.
    itemsize = jnp.dtype(table.dtype).itemsize
    tile_bytes = tm * D * itemsize
    vmem_limit = int(min(max(4 * tile_bytes + (2 << 20), 16 << 20), 48 << 20))

    out = pl.pallas_call(
        kernel,
        out_shape=jax.ShapeDtypeStruct((M_pad, D), table.dtype),
        grid_spec=pltpu.PrefetchScalarGridSpec(
            num_scalar_prefetch=1,                      # ids -> SMEM
            grid=(n_tiles,),
            in_specs=[
                pl.BlockSpec(memory_space=pl.ANY),      # table stays in HBM
            ],
            out_specs=pl.BlockSpec((tm, D), lambda i, ids: (i, 0)),
            scratch_shapes=[
                pltpu.VMEM((tm, D), table.dtype),       # gather landing buffer
                pltpu.SemaphoreType.DMA(()),            # shared DMA semaphore
            ],
        ),
        compiler_params=pltpu.CompilerParams(
            dimension_semantics=("parallel",),          # row tiles -> megacore
            vmem_limit_bytes=vmem_limit,
        ),
    )(ids_flat, table)

    if M_pad != M:
        out = out[:M]
    return out.reshape(orig_shape + (D,))


if __name__ == "__main__":
    # Small shapes consistent with the module: d_model=512, vocab=1000,
    # token ids of shape (batch=2, seq=8).
    B, S = 2, 8
    V, D = 1000, 512

    key = jax.random.PRNGKey(0)
    k_ids, k_tab = jax.random.split(key)
    ids = jax.random.randint(k_ids, (B, S), 0, V, dtype=jnp.int32)
    table = jax.random.normal(k_tab, (V, D), dtype=jnp.float32)

    out = embedding_forward(ids, table)
    out = jax.block_until_ready(out)

    # Pure-JAX reference (the DMA gather is bit-exact; scale op is identical).
    ref = table[ids] * math.sqrt(D)
    assert out.shape == (B, S, D)
    assert jnp.allclose(out, ref, atol=1e-6, rtol=1e-6)

    print("KERNEL_OK")
</pallas_src>

<mosaic_0001>
module attributes {stable_mosaic.version = 11 : i64} {
  func.func @_embedding_gather_kernel(%arg0: i32, %arg1: memref<16xi32, #tpu.memory_space<smem>>, %arg2: memref<1000x512xf32, #tpu.memory_space<any>>, %arg3: memref<16x512xf32, #tpu.memory_space<vmem>>, %arg4: memref<16x512xf32, #tpu.memory_space<vmem>>, %arg5: memref<!tpu.dma_semaphore, #tpu.memory_space<semaphore_mem>>) attributes {dimension_semantics = [#tpu.dimension_semantics<parallel>], iteration_bounds = array<i64: 1>, scalar_prefetch = 1 : i64, scratch_operands = 2 : i64, tpu.core_type = #tpu.core_type<tc>, window_params = [{}, {transform_indices = @transform_1, window_bounds = array<i64: 16, 512>}]} {
    %c16_i32 = arith.constant 16 : i32
    %0 = arith.muli %arg0, %c16_i32 : i32
    %c0_i32 = arith.constant 0 : i32
    %c16_i32_0 = arith.constant 16 : i32
    %1 = arith.addi %c0_i32, %c16_i32_0 : i32
    %c1_i32 = arith.constant 1 : i32
    scf.for %arg6 = %c0_i32 to %1 step %c1_i32  : i32 {
      %c1_i32_8 = arith.constant 1 : i32
      %7 = arith.muli %arg6, %c1_i32_8 : i32
      %c0_i32_9 = arith.constant 0 : i32
      %8 = arith.addi %c0_i32_9, %7 : i32
      %9 = arith.addi %0, %8 : i32
      %10 = arith.index_cast %9 : i32 to index
      %11 = memref.load %arg1[%10] : memref<16xi32, #tpu.memory_space<smem>>
      %c0_i32_10 = arith.constant 0 : i32
      %12 = tpu.memref_slice %arg2[%11, %c0_i32_10] : memref<1000x512xf32, #tpu.memory_space<any>> -> memref<1x512xf32, #tpu.memory_space<any>>
      %13 = tpu.memref_squeeze %12 : memref<1x512xf32, #tpu.memory_space<any>> -> memref<512xf32, #tpu.memory_space<any>>
      %c0_i32_11 = arith.constant 0 : i32
      %14 = tpu.memref_slice %arg4[%8, %c0_i32_11] : memref<16x512xf32, #tpu.memory_space<vmem>> -> memref<1x512xf32, #tpu.memory_space<vmem>>
      %15 = tpu.memref_squeeze %14 : memref<1x512xf32, #tpu.memory_space<vmem>> -> memref<512xf32, #tpu.memory_space<vmem>>
      tpu.enqueue_dma source(%13 : memref<512xf32, #tpu.memory_space<any>>) target(%15 : memref<512xf32, #tpu.memory_space<vmem>>) target_semaphore(%arg5 : memref<!tpu.dma_semaphore, #tpu.memory_space<semaphore_mem>>)
    }
    %c16_i32_1 = arith.constant 16 : i32
    %c0_i32_2 = arith.constant 0 : i32
    %c16_i32_3 = arith.constant 16 : i32
    %2 = arith.addi %c0_i32_2, %c16_i32_3 : i32
    %c1_i32_4 = arith.constant 1 : i32
    scf.for %arg6 = %c0_i32_2 to %2 step %c1_i32_4  : i32 {
      %c0_i32_8 = arith.constant 0 : i32
      %c0_i32_9 = arith.constant 0 : i32
      %c0_i32_10 = arith.constant 0 : i32
      %7 = tpu.memref_slice %arg2[%c0_i32_8, %c0_i32_10] : memref<1000x512xf32, #tpu.memory_space<any>> -> memref<1x512xf32, #tpu.memory_space<any>>
      %8 = tpu.memref_squeeze %7 : memref<1x512xf32, #tpu.memory_space<any>> -> memref<512xf32, #tpu.memory_space<any>>
      %c0_i32_11 = arith.constant 0 : i32
      %9 = tpu.memref_slice %arg4[%c0_i32_9, %c0_i32_11] : memref<16x512xf32, #tpu.memory_space<vmem>> -> memref<1x512xf32, #tpu.memory_space<vmem>>
      %10 = tpu.memref_squeeze %9 : memref<1x512xf32, #tpu.memory_space<vmem>> -> memref<512xf32, #tpu.memory_space<vmem>>
      tpu.wait_dma2 semaphore(%arg5 : memref<!tpu.dma_semaphore, #tpu.memory_space<semaphore_mem>>) src(%8 : memref<512xf32, #tpu.memory_space<any>>) dst(%10 : memref<512xf32, #tpu.memory_space<vmem>>)
    }
    %c0 = arith.constant 0 : index
    %c0_5 = arith.constant 0 : index
    %3 = vector.load %arg4[%c0, %c0_5] : memref<16x512xf32, #tpu.memory_space<vmem>>, vector<16x512xf32>
    %cst = arith.constant 22.6274166 : f32
    %4 = vector.broadcast %cst : f32 to vector<16x512xf32>
    %5 = arith.mulf %3, %4 : vector<16x512xf32>
    %c0_6 = arith.constant 0 : index
    %c0_7 = arith.constant 0 : index
    %6 = vector.load %arg3[%c0_6, %c0_7] : memref<16x512xf32, #tpu.memory_space<vmem>>, vector<16x512xf32>
    tpu.vector_store %arg3[%c0_6, %c0_7], %5 {strides = array<i32>} : memref<16x512xf32, #tpu.memory_space<vmem>>, vector<16x512xf32>,
    return
  }
  func.func @transform_1(%arg0: i32, %arg1: memref<16xi32, #tpu.memory_space<smem>>) -> (i32, i32) {
    %c0_i32 = arith.constant 0 : i32
    %c0_i32_0 = arith.constant 0 : i32
    return %arg0, %c0_i32 : i32, i32
  }
}

</mosaic_0001>

<llo_original>
// kernel: tpu_custom_call.1
$region0: #{tpu_custom_call.1}
  #allocation0 [shape = 'u32[]', space=smem, size = 0x4, offset = 0x4, fixed_abs, tag = 'smem constant byte address 0x4 - core index']
  #allocation1 [shape = 'u32[72,128]{1,0:T(1,128)}', space=vmem, size = 0x9000, scoped, tag = 'internal scratch']
  #allocation2 [shape = 'f32[16,512]{1,0:T(8,128)}', space=vmem, size = 0x8000, scoped, tag = 'scratch operand']
  #allocation3 [shape = 's32[1]{0}', space=sflag, size = 0x4, scoped, tag = 'scratch operand']
  #allocation4 [shape = 's32[1]{0}', space=sflag, size = 0x4, scoped, tag = 'scoped memory for tpu_custom_call.1']
  #allocation5 [shape = 'u8[512]{0}', space=smem, size = 0x200, scoped, tag = 'prefetched SMEM operand 0']
  #allocation8 [shape = 's32[]', space=sflag, size = 0x4, offset = 0, fixed_abs, tag = 'sflag constant byte address 0x0 - dummy sync flag']
  %s0 = inlined_call_operand.hbm [shape: s32[16], index: 0, kind: input, shape index: {}]
  %s1 = inlined_call_operand.hbm [shape: f32[1000,512], index: 1, kind: input, shape index: {}]
  %s2 = inlined_call_operand.hbm [shape: f32[16,512], index: 2, kind: output, shape index: {}]
  %s3 = sld [smem:[#allocation0]]
  $region24: #{tpu_custom_call.1} parent=0
    _
  %s5 = ssub.s32 1, %s3
  %s6 = scalar_select 0, %s5, %s3
  %s8 = sshll.u32 %s0, 4
  %s9 = int_to_ptr.hbm [resolvable:$true] %s8
  %11 = dma.hbm_to_smem %s9, 16, [#allocation5], [#allocation4]
  %13 = dma.done [#allocation4], 16
  %14 = sfence
  $region1: #{tpu_custom_call.1} parent=0
    #allocation6 [shape = 'u8[32768]{0}', space=vmem, size = 0x8000, scoped, tag = 'output window, operand 0, single buffered']
    #allocation7 [shape = 's32[1]{0}', space=sflag, size = 0x4, scoped, tag = 'scoped memory for tpu_custom_call.1']
    %15 = vsyncpa [#allocation7], 0
    %s16 = smul.u32 0, 16
    loop: start=0, step=1, limit=16
    $region2: #{tpu_custom_call.1} parent=1 // loop_pre_header
      _
    $region3: #{tpu_custom_call.1} parent=1 // loop_header
      %s18 = sphi 0, %s22
      %p19 = scmp.ge.s32.totalorder %s18, 16
    $region4: #{tpu_custom_call.1} parent=1 // loop_header_branch
      %21 = sbr.rel (%p19) target = $region8
    $region5: #{tpu_custom_call.1} parent=1 // loop_body
      %s23 = sadd.s32 %s16, %s18
      %s24 = sld [smem:[#allocation5 + %s23]]
      %s25 = sshrl.u32 %s24, 3
      %s26 = sand.u32 %s24, 7
      %s27 = smul.u32 %s25, 32
      %s28 = sadd.s32 %s26, %s27
      %s29 = scalar_lea.hbm %s1, %s28
      %s30 = sshrl.u32 %s18, 3
      %s31 = sand.u32 %s18, 7
      %s32 = smul.u32 %s30, 32
      %s33 = sadd.s32 %s31, %s32
      %s34 = scalar_lea.vmem [#allocation2], %s33
      %s35 = sshll.u32 %s29, 4
      %s36 = int_to_ptr.hbm [resolvable:$true] %s35
      %s37 = sshll.u32 %s34, 4
      %s38 = int_to_ptr.vmem [resolvable:$true] %s37
      %42 = dma.hbm_to_vmem [thread:$0]  %s36, 64, %s38, [#allocation3], 128, 128, 1
    $region6: #{tpu_custom_call.1} parent=1 // loop_footer
      %s22 = sadd.s32 1, %s18
    $region7: #{tpu_custom_call.1} parent=1 // loop_footer_branch
      %17 = sbr.rel target = $region3
    $region8: #{tpu_custom_call.1} parent=1 // loop_exit
      _
    loop: start=0, step=1, limit=16
    $region9: #{tpu_custom_call.1} parent=1 // loop_pre_header
      _
    $region10: #{tpu_custom_call.1} parent=1 // loop_header
      %s44 = sphi 0, %s48
      %p45 = scmp.ge.s32.totalorder %s44, 16
    $region11: #{tpu_custom_call.1} parent=1 // loop_header_branch
      %47 = sbr.rel (%p45) target = $region15
    $region12: #{tpu_custom_call.1} parent=1 // loop_body
      %50 = dma.done [#allocation3], 64
    $region13: #{tpu_custom_call.1} parent=1 // loop_footer
      %s48 = sadd.s32 1, %s44
    $region14: #{tpu_custom_call.1} parent=1 // loop_footer_branch
      %43 = sbr.rel target = $region10
    $region15: #{tpu_custom_call.1} parent=1 // loop_exit
      _
    %v51 = vld [vmem:[#allocation2] sm:$0xff]
    %v52 = vld [vmem:[#allocation2 + $0x8] sm:$0xff]
    %v53 = vld [vmem:[#allocation2 + $0x10] sm:$0xff]
    %v54 = vld [vmem:[#allocation2 + $0x18] sm:$0xff]
    %v55 = vld [vmem:[#allocation2 + $0x20] sm:$0xff]
    %v56 = vld [vmem:[#allocation2 + $0x28] sm:$0xff]
    %v57 = vld [vmem:[#allocation2 + $0x30] sm:$0xff]
    %v58 = vld [vmem:[#allocation2 + $0x38] sm:$0xff]
    %v59 = vmul.f32 %v51, 22.627417
    %v60 = vmul.f32 %v52, 22.627417
    %v61 = vmul.f32 %v53, 22.627417
    %v62 = vmul.f32 %v54, 22.627417
    %v63 = vmul.f32 %v55, 22.627417
    %v64 = vmul.f32 %v56, 22.627417
    %v65 = vmul.f32 %v57, 22.627417
    %v66 = vmul.f32 %v58, 22.627417
    %67 = vst [vmem:[#allocation6] sm:$0xff] %v59
    %68 = vst [vmem:[#allocation6 + $0x8] sm:$0xff] %v60
    %69 = vst [vmem:[#allocation6 + $0x10] sm:$0xff] %v61
    %70 = vst [vmem:[#allocation6 + $0x18] sm:$0xff] %v62
    %71 = vst [vmem:[#allocation6 + $0x20] sm:$0xff] %v63
    %72 = vst [vmem:[#allocation6 + $0x28] sm:$0xff] %v64
    %73 = vst [vmem:[#allocation6 + $0x30] sm:$0xff] %v65
    %74 = vst [vmem:[#allocation6 + $0x38] sm:$0xff] %v66
    // Predicated region
    $region16: #{tpu_custom_call.1} parent=1 // pred_check
      _
    $region17: #{tpu_custom_call.1} parent=1 // pred_check_branch
      %76 = sbr.rel (0) target = $region19
    $region18: #{tpu_custom_call.1} parent=1 // pred_region
      %78 = vsyncadd [#allocation7], 0
      %s79 = sshll.u32 [#allocation6], 4
      %s80 = int_to_ptr.vmem [resolvable:$true] %s79
      %s81 = sshll.u32 %s2, 4
      %s82 = int_to_ptr.hbm [resolvable:$true] %s81
      %87 = dma.vmem_to_hbm [thread:$0]  %s80, 1024, %s82, [#allocation7], 512, 512, 32
    $region19: #{tpu_custom_call.1} parent=1 // pred_fallthru
      _
    // Predicated region
    $region20: #{tpu_custom_call.1} parent=1 // pred_check
      _
    $region21: #{tpu_custom_call.1} parent=1 // pred_check_branch
      %89 = sbr.rel (0) target = $region23
    $region22: #{tpu_custom_call.1} parent=1 // pred_region
      %91 = dma.done [#allocation7], 1024
    $region23: #{tpu_custom_call.1} parent=1 // pred_fallthru
      _
    %92 = vsyncpa [#allocation7], 1
  %93 = vsyncmov [#allocation3]
  %s94 = vpop.sfrf %93
  %p95 = scmp.eq.s32.totalorder %s94, 0
  %p96 = pneg %p95
  %98 = shalt.err (%p96)

</llo_original>
